<compile_context>
chip_gen: v6e
topology: v6e:2x2x1
jax: 0.10.0
libtpu: 0.0.40
codegen_flags: <defaults>
</compile_context>

<pallas_src>
import numpy as np
import jax
import jax.numpy as jnp
from jax.experimental import pallas as pl
from jax.experimental.pallas import tpu as pltpu


_LANE_CAP = 4096            # max last-dim width of the flat copy slab
_MAX_CHUNKS = 4             # 2-4 concurrent DMA streams is plenty for HBM BW
_MIN_CHUNK_BYTES = 512 << 10  # don't split copies into chunks smaller than this


def _pick_lane_width(total):
    """Largest multiple of 128 (<= _LANE_CAP) that divides `total`, else 0."""
    best = 0
    lane = 128
    while lane <= min(_LANE_CAP, total):
        if total % lane == 0:
            best = lane
        lane += 128
    return best


def _row_chunks(rows, row_bytes, pack):
    """Static (start, size) row ranges along dim 0 for chunked DMA.

    Chunk starts are aligned to the dtype packing factor; the last chunk may
    be ragged (it ends at the array boundary, which DMA handles natively).
    """
    total_bytes = rows * row_bytes
    n = int(min(_MAX_CHUNKS, max(1, total_bytes // _MIN_CHUNK_BYTES)))
    n = int(min(n, max(1, rows // pack)))
    chunk_rows = -(-rows // n)                      # ceil(rows / n)
    chunk_rows = -(-chunk_rows // pack) * pack      # round up to packing factor
    chunks = []
    start = 0
    while start < rows:
        size = min(chunk_rows, rows - start)
        chunks.append((start, size))
        start += size
    return tuple(chunks)


def _make_dma_copy_kernel(chunks):
    """Direct HBM->HBM copy: start all chunked DMAs, then wait on all of them."""

    def kernel(x_hbm, o_hbm, sem):
        copies = []
        for i, (start, size) in enumerate(chunks):
            cp = pltpu.make_async_copy(
                x_hbm.at[pl.ds(start, size)],
                o_hbm.at[pl.ds(start, size)],
                sem.at[i],
            )
            cp.start()
            copies.append(cp)
        for cp in copies:
            cp.wait()

    return kernel


class Reshape:
    """JAX/Pallas port of the PyTorch Reshape module."""

    def __init__(self, *shape):
        self.shape = tuple(int(s) for s in shape)
        self._k = int(np.prod(self.shape)) if self.shape else 1

    def __call__(self, x, force_copy=False):
        total = int(np.prod(x.shape))
        assert total % self._k == 0, "input size not divisible by prod(shape)"
        n = total // self._k
        out_shape = (n,) + self.shape

        if not force_copy:
            # Fast path (default): metadata-only reshape, zero HBM traffic.
            return jnp.reshape(x, out_shape)

        # ---- Direct HBM->HBM DMA copy path (explicit memory pass) ----
        itemsize = int(np.dtype(x.dtype).itemsize)
        lane = _pick_lane_width(total)
        if lane:
            # Lane-dense flat slab (metadata-only reshape of contiguous data);
            # chunk the DMA along the row axis at pack-aligned boundaries.
            rows = total // lane
            slab_shape = (rows, lane)
            # Sub-32-bit dtypes pack along sublanes: 8 rows (32-bit),
            # 16 (16-bit), 32 (8-bit).
            pack = max(8, 8 * (4 // max(itemsize, 1)))
            chunks = _row_chunks(rows, lane * itemsize, pack)
        else:
            # Size not a multiple of 128: one whole-ref DMA of the original
            # shape (DMA has no (8,128) BlockSpec constraint), so force_copy
            # never silently degrades to the metadata path.
            slab_shape = tuple(int(d) for d in x.shape)
            chunks = ((0, slab_shape[0]),)

        x_slab = jnp.reshape(x, slab_shape)  # metadata-only

        out_slab = pl.pallas_call(
            _make_dma_copy_kernel(chunks),
            out_shape=jax.ShapeDtypeStruct(slab_shape, x.dtype),
            in_specs=[pl.BlockSpec(memory_space=pl.ANY)],
            out_specs=pl.BlockSpec(memory_space=pl.ANY),
            scratch_shapes=[pltpu.SemaphoreType.DMA((len(chunks),))],
            compiler_params=pltpu.CompilerParams(has_side_effects=True),
            cost_estimate=pl.CostEstimate(
                flops=0, transcendentals=0,
                bytes_accessed=2 * total * itemsize),
        )(x_slab)

        return jnp.reshape(out_slab, out_shape)


if __name__ == "__main__":
    key = jax.random.PRNGKey(0)
    k1, k2, k3, k4, k5 = jax.random.split(key, 5)

    # Typical DCGAN usage: project-layer output (B, C*H*W) -> (B, C, H, W).
    B, C, H, W = 2, 4, 16, 16
    x = jax.random.normal(k1, (B, C * H * W), dtype=jnp.float32)
    module = Reshape(C, H, W)
    y_ref = jnp.reshape(x, (-1, C, H, W))

    # 1) Default path: metadata-only reshape (no kernel, no HBM traffic).
    y_fast = jax.block_until_ready(module(x))
    assert y_fast.shape == (B, C, H, W) and y_fast.dtype == x.dtype
    np.testing.assert_array_equal(np.asarray(y_fast), np.asarray(y_ref))

    # 2) Forced copy path (small tensor -> single whole-ref HBM->HBM DMA).
    y_copy = jax.block_until_ready(module(x, force_copy=True))
    np.testing.assert_array_equal(np.asarray(y_copy), np.asarray(y_ref))

    # 3) Forced copy, multi-chunk DMA with even chunks:
    #    (512, 1024) f32 -> slab (128, 4096), 4 chunks of 32 rows.
    x2 = jax.random.normal(k2, (512, 1024), dtype=jnp.float32)
    m2 = Reshape(32, 32)
    y2 = jax.block_until_ready(m2(x2, force_copy=True))
    np.testing.assert_array_equal(np.asarray(y2),
                                  np.asarray(jnp.reshape(x2, (-1, 32, 32))))
    assert y2.shape == (512, 32, 32)

    # 4) Forced copy, multi-chunk DMA with a ragged last chunk:
    #    (300, 1024) f32 -> slab (75, 4096), chunks (0,40) and (40,35).
    x3 = jax.random.normal(k3, (300, 1024), dtype=jnp.float32)
    m3 = Reshape(1024)
    y3 = jax.block_until_ready(m3(x3, force_copy=True))
    np.testing.assert_array_equal(np.asarray(y3),
                                  np.asarray(jnp.reshape(x3, (-1, 1024))))
    assert y3.shape == (300, 1024)

    # 5) Forced copy with a sub-32-bit dtype (bf16, packing factor 16).
    x4 = jax.random.normal(k4, (40, 256), dtype=jnp.bfloat16)
    m4 = Reshape(16, 16)
    y4 = jax.block_until_ready(m4(x4, force_copy=True))
    np.testing.assert_array_equal(np.asarray(y4),
                                  np.asarray(jnp.reshape(x4, (-1, 16, 16))))
    assert y4.shape == (40, 16, 16) and y4.dtype == jnp.bfloat16

    # 6) Forced copy where total is NOT a multiple of 128: whole-ref DMA of
    #    the original shape (no silent fallback to the metadata path).
    x5 = jax.random.normal(k5, (6, 50), dtype=jnp.float32)
    m5 = Reshape(2, 25)
    y5 = jax.block_until_ready(m5(x5, force_copy=True))
    np.testing.assert_array_equal(np.asarray(y5),
                                  np.asarray(jnp.reshape(x5, (-1, 2, 25))))
    assert y5.shape == (6, 2, 25)

    print("KERNEL_OK")
</pallas_src>

<mosaic_0001>
module attributes {stable_mosaic.version = 11 : i64} {
  func.func @kernel(%arg0: memref<1x2048xf32, #tpu.memory_space<any>>, %arg1: memref<1x2048xf32, #tpu.memory_space<any>>, %arg2: memref<1x!tpu.dma_semaphore, #tpu.memory_space<semaphore_mem>>) attributes {dimension_semantics = [], scalar_prefetch = 0 : i64, scratch_operands = 1 : i64, tpu.core_type = #tpu.core_type<tc>} {
    %c0_i32 = arith.constant 0 : i32
    %c0_i32_0 = arith.constant 0 : i32
    %c0_i32_1 = arith.constant 0 : i32
    %0 = tpu.memref_slice %arg0[%c0_i32_0, %c0_i32_1] : memref<1x2048xf32, #tpu.memory_space<any>> -> memref<1x2048xf32, #tpu.memory_space<any>>
    %c0_i32_2 = arith.constant 0 : i32
    %c0_i32_3 = arith.constant 0 : i32
    %1 = tpu.memref_slice %arg1[%c0_i32_2, %c0_i32_3] : memref<1x2048xf32, #tpu.memory_space<any>> -> memref<1x2048xf32, #tpu.memory_space<any>>
    %2 = tpu.memref_slice %arg2[%c0_i32] : memref<1x!tpu.dma_semaphore, #tpu.memory_space<semaphore_mem>> -> memref<1x!tpu.dma_semaphore, #tpu.memory_space<semaphore_mem>>
    %3 = tpu.memref_squeeze %2 : memref<1x!tpu.dma_semaphore, #tpu.memory_space<semaphore_mem>> -> memref<!tpu.dma_semaphore, #tpu.memory_space<semaphore_mem>>
    tpu.enqueue_dma source(%0 : memref<1x2048xf32, #tpu.memory_space<any>>) target(%1 : memref<1x2048xf32, #tpu.memory_space<any>>) target_semaphore(%3 : memref<!tpu.dma_semaphore, #tpu.memory_space<semaphore_mem>>)
    %c0_i32_4 = arith.constant 0 : i32
    %c0_i32_5 = arith.constant 0 : i32
    %c0_i32_6 = arith.constant 0 : i32
    %4 = tpu.memref_slice %arg0[%c0_i32_5, %c0_i32_6] : memref<1x2048xf32, #tpu.memory_space<any>> -> memref<1x2048xf32, #tpu.memory_space<any>>
    %c0_i32_7 = arith.constant 0 : i32
    %c0_i32_8 = arith.constant 0 : i32
    %5 = tpu.memref_slice %arg1[%c0_i32_7, %c0_i32_8] : memref<1x2048xf32, #tpu.memory_space<any>> -> memref<1x2048xf32, #tpu.memory_space<any>>
    %6 = tpu.memref_slice %arg2[%c0_i32_4] : memref<1x!tpu.dma_semaphore, #tpu.memory_space<semaphore_mem>> -> memref<1x!tpu.dma_semaphore, #tpu.memory_space<semaphore_mem>>
    %7 = tpu.memref_squeeze %6 : memref<1x!tpu.dma_semaphore, #tpu.memory_space<semaphore_mem>> -> memref<!tpu.dma_semaphore, #tpu.memory_space<semaphore_mem>>
    tpu.wait_dma2 semaphore(%7 : memref<!tpu.dma_semaphore, #tpu.memory_space<semaphore_mem>>) src(%4 : memref<1x2048xf32, #tpu.memory_space<any>>) dst(%5 : memref<1x2048xf32, #tpu.memory_space<any>>)
    return
  }
}

</mosaic_0001>

<llo_original>
// kernel: tpu_custom_call.1
$region0: #{tpu_custom_call.1}
  #allocation0 [shape = 'u32[]', space=smem, size = 0x4, offset = 0x4, fixed_abs, tag = 'smem constant byte address 0x4 - core index']
  #allocation1 [shape = 'u32[144,128]{1,0:T(1,128)}', space=vmem, size = 0x12000, scoped, tag = 'internal scratch']
  #allocation2 [shape = 's32[1]{0}', space=sflag, size = 0x4, scoped, tag = 'scratch operand']
  #allocation3 [shape = 's32[]', space=sflag, size = 0x4, offset = 0, fixed_abs, tag = 'sflag constant byte address 0x0 - dummy sync flag']
  #allocation4 [shape = 'u32[0]{0}', space=smem, size = 0, offset = 0, fixed_abs, tag = 'smem constant byte address 0x0 - null']
  %s0 = inlined_call_operand.hbm [shape: f32[1,2048], index: 0, kind: input, shape index: {}]
  %s1 = inlined_call_operand.hbm [shape: f32[1,2048], index: 1, kind: output, shape index: {}]
  %s2 = sld [smem:[#allocation0]]
  $region2: #{tpu_custom_call.1} parent=0
    _
  %s4 = ssub.s32 1, %s2
  %s5 = scalar_select 0, %s4, %s2
  %s7 = sshll.u32 1, 14
  %s8 = sxor.u32 4294967295, %s7
  %12 = dma.general %s0, 256, %s1, [#allocation2], 131072, [#allocation4], 0, 0
  %s13 = smul.u32 1, 16
  %s14 = sshll.u32 %s13, 4
  %15 = dma.done [#allocation2], %s14
  %16 = vsyncmov [#allocation2]
  %s17 = vpop.sfrf %16
  %p18 = scmp.eq.s32.totalorder %s17, 0
  %p19 = pneg %p18
  %21 = shalt.err (%p19)

</llo_original>
